<compile_context>
chip_gen: v7x
topology: tpu7x:2x2x1
jax: 0.10.0
libtpu: 0.0.40
codegen_flags: <defaults>
</compile_context>

<pallas_src>
import jax
import jax.numpy as jnp
from jax import lax
from jax.experimental import pallas as pl
from jax.experimental.pallas import tpu as pltpu

LANE = 128          # TPU lane width (last-dim tiling unit)
ROW_ALIGN = 16      # bf16 sublane packing -> keep row tiles multiple of 16
MID_UNROLL_MAX = 4  # static unroll of mid layers up to this many


def _round_up(x, m):
    return (x + m - 1) // m * m


# --------------------------------------------------------------------------- #
# Kernels
# --------------------------------------------------------------------------- #
def _layer(h, w, b_f32, relu):
    """One linear layer: bf16 operands on the MXU, f32 accumulate/activate."""
    acc = jnp.dot(h.astype(w.dtype), w, preferred_element_type=jnp.float32)
    acc = acc + b_f32
    return jnp.maximum(acc, 0.0) if relu else acc


def _mlp_kernel_unrolled(x_ref, w_in_ref, b_in_ref, w_mid_ref, b_mid_ref,
                         w_out_ref, b_out_ref, o_ref):
    h = _layer(x_ref[...], w_in_ref[...], b_in_ref[...], relu=True)
    for l in range(w_mid_ref.shape[0]):          # static unroll (few layers)
        h = _layer(h, w_mid_ref[l], b_mid_ref[l], relu=True)
    o_ref[...] = _layer(h, w_out_ref[...], b_out_ref[...],
                        relu=False).astype(o_ref.dtype)


def _mlp_kernel_looped(x_ref, w_in_ref, b_in_ref, w_mid_ref, b_mid_ref,
                       w_out_ref, b_out_ref, o_ref):
    h = _layer(x_ref[...], w_in_ref[...], b_in_ref[...], relu=True)

    def body(l, h):
        return _layer(h, w_mid_ref[l], b_mid_ref[l], relu=True)

    h = lax.fori_loop(0, w_mid_ref.shape[0], body, h)
    o_ref[...] = _layer(h, w_out_ref[...], b_out_ref[...],
                        relu=False).astype(o_ref.dtype)


def _mlp_kernel_nomid(x_ref, w_in_ref, b_in_ref, w_out_ref, b_out_ref, o_ref):
    h = _layer(x_ref[...], w_in_ref[...], b_in_ref[...], relu=True)
    o_ref[...] = _layer(h, w_out_ref[...], b_out_ref[...],
                        relu=False).astype(o_ref.dtype)


# --------------------------------------------------------------------------- #
# One-time weight packing (call at init, NOT per forward)
# --------------------------------------------------------------------------- #
def pack_mlp_params(W_in, b_in, W_mid, b_mid, W_out, b_out,
                    *, compute_dtype=jnp.bfloat16):
    """Transpose to (in, out), zero-pad hidden dim to 128, cast to bf16.

    PyTorch nn.Linear layout in:  W (out, in), b (out,).
    Zero-padded hidden columns produce exact zeros through bias-add + ReLU and
    zero-padded rows contribute nothing downstream, so results are unchanged.
    """
    num_inter, num_in = W_in.shape
    num_out = W_out.shape[0]
    n_mid = 0 if W_mid is None else int(W_mid.shape[0])
    ninter_p = _round_up(num_inter, LANE)
    cdt = compute_dtype

    w_in_p = jnp.zeros((num_in, ninter_p), cdt).at[:, :num_inter].set(
        W_in.T.astype(cdt))
    b_in_p = jnp.zeros((1, ninter_p), jnp.float32).at[:, :num_inter].set(
        b_in.astype(jnp.float32))
    # Output kept at its true width -> small, unpadded writeback.
    w_out_p = jnp.zeros((ninter_p, num_out), cdt).at[:num_inter, :].set(
        W_out.T.astype(cdt))
    b_out_p = b_out.astype(jnp.float32).reshape(1, num_out)

    if n_mid > 0:
        w_mid_p = jnp.zeros((n_mid, ninter_p, ninter_p), cdt)
        w_mid_p = w_mid_p.at[:, :num_inter, :num_inter].set(
            jnp.transpose(W_mid, (0, 2, 1)).astype(cdt))
        b_mid_p = jnp.zeros((n_mid, 1, ninter_p), jnp.float32)
        b_mid_p = b_mid_p.at[:, 0, :num_inter].set(b_mid.astype(jnp.float32))
    else:
        w_mid_p, b_mid_p = None, None

    return {
        "w_in": w_in_p, "b_in": b_in_p,
        "w_mid": w_mid_p, "b_mid": b_mid_p,
        "w_out": w_out_p, "b_out": b_out_p,
        "num_in": int(num_in), "num_inter": int(num_inter),
        "num_out": int(num_out), "ninter_p": int(ninter_p),
        "n_mid": int(n_mid),
    }


def _physical_vmem_bytes():
    try:
        info = pltpu.get_tpu_info()
        return int(getattr(info, "vmem_capacity_bytes", 64 << 20))
    except Exception:
        return 64 << 20     # safe lower bound across v5e / v6e / v7x


# --------------------------------------------------------------------------- #
# Forward (hot path): one fused pallas_call, no extra XLA passes over x/out
# --------------------------------------------------------------------------- #
def mlp_forward(x, params, *, tm=None):
    """x: (B, num_in) -> (B, num_out) in x.dtype, using pre-packed params."""
    B, num_in = x.shape
    assert num_in == params["num_in"]
    num_out = params["num_out"]
    ninter_p = params["ninter_p"]
    n_mid = params["n_mid"]
    out_dtype = x.dtype
    x_itemsize = jnp.dtype(x.dtype).itemsize

    # ---- row tiling ---------------------------------------------------------
    if tm is None:
        b_aligned = _round_up(max(B, 1), ROW_ALIGN)
        if b_aligned <= 1024:
            # Small batch: a single grid step; nothing to pipeline, and extra
            # steps just add fixed per-step overhead on single-core chips.
            tm = b_aligned
        else:
            # Large batch: >=4 steps so v7x's two TensorCores each get >=2
            # pipelined steps; rows stay a multiple of 16 for bf16 packing.
            tm = min(512, _round_up(pl.cdiv(B, 4), ROW_ALIGN))
    B_pad = _round_up(B, tm)
    x_p = x if B_pad == B else jnp.pad(x, ((0, B_pad - B), (0, 0)))
    grid = (B_pad // tm,)

    # ---- cost estimate & VMEM budget ----------------------------------------
    w_bytes = (params["w_in"].size * params["w_in"].dtype.itemsize
               + params["w_out"].size * params["w_out"].dtype.itemsize
               + params["b_in"].size * 4 + params["b_out"].size * 4)
    if n_mid > 0:
        w_bytes += (params["w_mid"].size * params["w_mid"].dtype.itemsize
                    + params["b_mid"].size * 4)
    flops = 2 * B_pad * (num_in * ninter_p + n_mid * ninter_p * ninter_p
                         + ninter_p * num_out)
    bytes_accessed = (B_pad * num_in * x_itemsize + w_bytes
                      + B_pad * num_out * jnp.dtype(out_dtype).itemsize)
    cost = pl.CostEstimate(flops=flops, transcendentals=0,
                           bytes_accessed=bytes_accessed)

    x_blk_bytes = tm * num_in * x_itemsize
    o_blk_bytes = tm * num_out * jnp.dtype(out_dtype).itemsize
    act_bytes = 2 * tm * ninter_p * 4            # live f32 activations
    # Weights are single-buffered (constant block index) -> count them once.
    needed = w_bytes + 2 * (x_blk_bytes + o_blk_bytes) + act_bytes + (8 << 20)
    vmem_cap = _physical_vmem_bytes() - (2 << 20)
    vmem_limit = int(min(max(needed, 16 << 20), vmem_cap))

    # ---- specs ---------------------------------------------------------------
    resident = dict(pipeline_mode=pl.Buffered(1))   # constant index -> 1 buffer
    x_spec = pl.BlockSpec((tm, num_in), lambda i: (i, 0))
    o_spec = pl.BlockSpec((tm, num_out), lambda i: (i, 0))
    w_in_spec = pl.BlockSpec((num_in, ninter_p), lambda i: (0, 0), **resident)
    b_in_spec = pl.BlockSpec((1, ninter_p), lambda i: (0, 0), **resident)
    w_out_spec = pl.BlockSpec((ninter_p, num_out), lambda i: (0, 0), **resident)
    b_out_spec = pl.BlockSpec((1, num_out), lambda i: (0, 0), **resident)

    if n_mid > 0:
        kernel = (_mlp_kernel_unrolled if n_mid <= MID_UNROLL_MAX
                  else _mlp_kernel_looped)
        in_specs = [x_spec, w_in_spec, b_in_spec,
                    pl.BlockSpec((n_mid, ninter_p, ninter_p),
                                 lambda i: (0, 0, 0), **resident),
                    pl.BlockSpec((n_mid, 1, ninter_p),
                                 lambda i: (0, 0, 0), **resident),
                    w_out_spec, b_out_spec]
        args = (x_p, params["w_in"], params["b_in"], params["w_mid"],
                params["b_mid"], params["w_out"], params["b_out"])
    else:
        kernel = _mlp_kernel_nomid
        in_specs = [x_spec, w_in_spec, b_in_spec, w_out_spec, b_out_spec]
        args = (x_p, params["w_in"], params["b_in"], params["w_out"],
                params["b_out"])

    out_pad = pl.pallas_call(
        kernel,
        out_shape=jax.ShapeDtypeStruct((B_pad, num_out), out_dtype),
        grid_spec=pltpu.PrefetchScalarGridSpec(
            num_scalar_prefetch=0,
            grid=grid,
            in_specs=in_specs,
            out_specs=o_spec,
        ),
        compiler_params=pltpu.CompilerParams(
            dimension_semantics=("parallel",),
            vmem_limit_bytes=vmem_limit),
        cost_estimate=cost,
    )(*args)

    return out_pad if B_pad == B else out_pad[:B]


# Convenience one-shot wrapper (packs per call; prefer pack once + mlp_forward)
def mlp_pallas(x, W_in, b_in, W_mid, b_mid, W_out, b_out, **kw):
    return mlp_forward(x, pack_mlp_params(W_in, b_in, W_mid, b_mid,
                                          W_out, b_out), **kw)


# ------------------------------ references -----------------------------------
def mlp_reference_f32(x, W_in, b_in, W_mid, b_mid, W_out, b_out):
    h = jnp.maximum(x @ W_in.T + b_in, 0.0)
    for l in range(W_mid.shape[0]):
        h = jnp.maximum(h @ W_mid[l].T + b_mid[l], 0.0)
    return h @ W_out.T + b_out


def mlp_reference_bf16(x, W_in, b_in, W_mid, b_mid, W_out, b_out):
    """Mirrors the kernel's bf16-operand / f32-accumulate arithmetic."""
    bf = jnp.bfloat16
    h = jnp.dot(x.astype(bf), W_in.T.astype(bf),
                preferred_element_type=jnp.float32) + b_in
    h = jnp.maximum(h, 0.0)
    for l in range(W_mid.shape[0]):
        h = jnp.dot(h.astype(bf), W_mid[l].T.astype(bf),
                    preferred_element_type=jnp.float32) + b_mid[l]
        h = jnp.maximum(h, 0.0)
    return jnp.dot(h.astype(bf), W_out.T.astype(bf),
                   preferred_element_type=jnp.float32) + b_out


if __name__ == "__main__":
    # MLP(num_in=32, num_inter=64, num_out=16, num_layers=4) -> 2 mid layers.
    num_in, num_inter, num_out, num_layers = 32, 64, 16, 4
    B = 256

    key = jax.random.PRNGKey(0)
    ks = jax.random.split(key, 7)
    scale = 0.1

    x = jax.random.normal(ks[0], (B, num_in), dtype=jnp.float32)
    # PyTorch nn.Linear layout: W is (out, in), b is (out,)
    W_in = scale * jax.random.normal(ks[1], (num_inter, num_in), jnp.float32)
    b_in = scale * jax.random.normal(ks[2], (num_inter,), jnp.float32)
    W_mid = scale * jax.random.normal(
        ks[3], (num_layers - 2, num_inter, num_inter), jnp.float32)
    b_mid = scale * jax.random.normal(
        ks[4], (num_layers - 2, num_inter), jnp.float32)
    W_out = scale * jax.random.normal(ks[5], (num_out, num_inter), jnp.float32)
    b_out = scale * jax.random.normal(ks[6], (num_out,), jnp.float32)

    # One-time packing at "init" -- hoisted out of the per-call hot path.
    params = pack_mlp_params(W_in, b_in, W_mid, b_mid, W_out, b_out)
    _ = jax.block_until_ready(params["w_in"])

    out = mlp_forward(x, params)
    out = jax.block_until_ready(out)
    assert out.shape == (B, num_out)

    ref_bf16 = mlp_reference_bf16(x, W_in, b_in, W_mid, b_mid, W_out, b_out)
    ref_f32 = mlp_reference_f32(x, W_in, b_in, W_mid, b_mid, W_out, b_out)

    # Tight check vs. the arithmetic-matched bf16 reference,
    # loose sanity check vs. the pure-f32 module reference.
    assert jnp.allclose(out, ref_bf16, atol=1e-3, rtol=1e-3), \
        "mismatch vs bf16-matched reference"
    assert jnp.allclose(out, ref_f32, atol=5e-2, rtol=5e-2), \
        "mismatch vs f32 reference"

    print("KERNEL_OK")
</pallas_src>

<mosaic_0001>
module attributes {stable_mosaic.version = 11 : i64} {
  func.func @_mlp_kernel_unrolled(%arg0: i32, %arg1: memref<256x32xf32, #tpu.memory_space<vmem>>, %arg2: memref<32x128xbf16, #tpu.memory_space<vmem>>, %arg3: memref<1x128xf32, #tpu.memory_space<vmem>>, %arg4: memref<2x128x128xbf16, #tpu.memory_space<vmem>>, %arg5: memref<2x1x128xf32, #tpu.memory_space<vmem>>, %arg6: memref<128x16xbf16, #tpu.memory_space<vmem>>, %arg7: memref<1x16xf32, #tpu.memory_space<vmem>>, %arg8: memref<256x16xf32, #tpu.memory_space<vmem>>) attributes {dimension_semantics = [#tpu.dimension_semantics<parallel>], iteration_bounds = array<i64: 1>, scalar_prefetch = 0 : i64, scratch_operands = 0 : i64, tpu.core_type = #tpu.core_type<tc>, window_params = [{transform_indices = @transform_0, window_bounds = array<i64: 256, 32>}, {pipeline_mode = #tpu.pipeline_mode<synchronous>, transform_indices = @transform_1, window_bounds = array<i64: 32, 128>}, {pipeline_mode = #tpu.pipeline_mode<synchronous>, transform_indices = @transform_2, window_bounds = array<i64: 1, 128>}, {pipeline_mode = #tpu.pipeline_mode<synchronous>, transform_indices = @transform_3, window_bounds = array<i64: 2, 128, 128>}, {pipeline_mode = #tpu.pipeline_mode<synchronous>, transform_indices = @transform_4, window_bounds = array<i64: 2, 1, 128>}, {pipeline_mode = #tpu.pipeline_mode<synchronous>, transform_indices = @transform_5, window_bounds = array<i64: 128, 16>}, {pipeline_mode = #tpu.pipeline_mode<synchronous>, transform_indices = @transform_6, window_bounds = array<i64: 1, 16>}, {transform_indices = @transform_7, window_bounds = array<i64: 256, 16>}]} {
    %c0 = arith.constant 0 : index
    %c0_0 = arith.constant 0 : index
    %0 = vector.load %arg1[%c0, %c0_0] : memref<256x32xf32, #tpu.memory_space<vmem>>, vector<256x32xf32>
    %c0_1 = arith.constant 0 : index
    %c0_2 = arith.constant 0 : index
    %1 = vector.load %arg2[%c0_1, %c0_2] : memref<32x128xbf16, #tpu.memory_space<vmem>>, vector<32x128xbf16>
    %c0_3 = arith.constant 0 : index
    %c0_4 = arith.constant 0 : index
    %2 = vector.load %arg3[%c0_3, %c0_4] : memref<1x128xf32, #tpu.memory_space<vmem>>, vector<1x128xf32>
    %3 = arith.truncf %0 : vector<256x32xf32> to vector<256x32xbf16>
    %cst = arith.constant dense<0.000000e+00> : vector<256x128xf32>
    %4 = tpu.matmul %3, %1, %cst {dimension_numbers = #tpu.dot_dimension_numbers<[1], [0], [0], [1], [0, 0, 1, 1], [], []>} : vector<256x32xbf16>, vector<32x128xbf16>, vector<256x128xf32> -> vector<256x128xf32>
    %5 = vector.broadcast %2 : vector<1x128xf32> to vector<256x128xf32>
    %6 = arith.addf %4, %5 : vector<256x128xf32>
    %cst_5 = arith.constant 0.000000e+00 : f32
    %7 = vector.broadcast %cst_5 : f32 to vector<256x128xf32>
    %8 = arith.maximumf %6, %7 : vector<256x128xf32>
    %c0_6 = arith.constant 0 : index
    %c0_7 = arith.constant 0 : index
    %c0_8 = arith.constant 0 : index
    %9 = vector.load %arg4[%c0_6, %c0_7, %c0_8] : memref<2x128x128xbf16, #tpu.memory_space<vmem>>, vector<1x128x128xbf16>
    %10 = vector.shape_cast %9 : vector<1x128x128xbf16> to vector<128x128xbf16>
    %c0_9 = arith.constant 0 : index
    %c0_10 = arith.constant 0 : index
    %c0_11 = arith.constant 0 : index
    %11 = vector.load %arg5[%c0_9, %c0_10, %c0_11] : memref<2x1x128xf32, #tpu.memory_space<vmem>>, vector<1x1x128xf32>
    %12 = vector.shape_cast %11 : vector<1x1x128xf32> to vector<1x128xf32>
    %13 = arith.truncf %8 : vector<256x128xf32> to vector<256x128xbf16>
    %cst_12 = arith.constant dense<0.000000e+00> : vector<256x128xf32>
    %14 = tpu.matmul %13, %10, %cst_12 {dimension_numbers = #tpu.dot_dimension_numbers<[1], [0], [0], [1], [0, 0, 1, 1], [], []>} : vector<256x128xbf16>, vector<128x128xbf16>, vector<256x128xf32> -> vector<256x128xf32>
    %15 = vector.broadcast %12 : vector<1x128xf32> to vector<256x128xf32>
    %16 = arith.addf %14, %15 : vector<256x128xf32>
    %cst_13 = arith.constant 0.000000e+00 : f32
    %17 = vector.broadcast %cst_13 : f32 to vector<256x128xf32>
    %18 = arith.maximumf %16, %17 : vector<256x128xf32>
    %c1 = arith.constant 1 : index
    %c0_14 = arith.constant 0 : index
    %c0_15 = arith.constant 0 : index
    %19 = vector.load %arg4[%c1, %c0_14, %c0_15] : memref<2x128x128xbf16, #tpu.memory_space<vmem>>, vector<1x128x128xbf16>
    %20 = vector.shape_cast %19 : vector<1x128x128xbf16> to vector<128x128xbf16>
    %c1_16 = arith.constant 1 : index
    %c0_17 = arith.constant 0 : index
    %c0_18 = arith.constant 0 : index
    %21 = vector.load %arg5[%c1_16, %c0_17, %c0_18] : memref<2x1x128xf32, #tpu.memory_space<vmem>>, vector<1x1x128xf32>
    %22 = vector.shape_cast %21 : vector<1x1x128xf32> to vector<1x128xf32>
    %23 = arith.truncf %18 : vector<256x128xf32> to vector<256x128xbf16>
    %cst_19 = arith.constant dense<0.000000e+00> : vector<256x128xf32>
    %24 = tpu.matmul %23, %20, %cst_19 {dimension_numbers = #tpu.dot_dimension_numbers<[1], [0], [0], [1], [0, 0, 1, 1], [], []>} : vector<256x128xbf16>, vector<128x128xbf16>, vector<256x128xf32> -> vector<256x128xf32>
    %25 = vector.broadcast %22 : vector<1x128xf32> to vector<256x128xf32>
    %26 = arith.addf %24, %25 : vector<256x128xf32>
    %cst_20 = arith.constant 0.000000e+00 : f32
    %27 = vector.broadcast %cst_20 : f32 to vector<256x128xf32>
    %28 = arith.maximumf %26, %27 : vector<256x128xf32>
    %c0_21 = arith.constant 0 : index
    %c0_22 = arith.constant 0 : index
    %29 = vector.load %arg6[%c0_21, %c0_22] : memref<128x16xbf16, #tpu.memory_space<vmem>>, vector<128x16xbf16>
    %c0_23 = arith.constant 0 : index
    %c0_24 = arith.constant 0 : index
    %30 = vector.load %arg7[%c0_23, %c0_24] : memref<1x16xf32, #tpu.memory_space<vmem>>, vector<1x16xf32>
    %31 = arith.truncf %28 : vector<256x128xf32> to vector<256x128xbf16>
    %cst_25 = arith.constant dense<0.000000e+00> : vector<256x16xf32>
    %32 = tpu.matmul %31, %29, %cst_25 {dimension_numbers = #tpu.dot_dimension_numbers<[1], [0], [0], [1], [0, 0, 1, 1], [], []>} : vector<256x128xbf16>, vector<128x16xbf16>, vector<256x16xf32> -> vector<256x16xf32>
    %33 = vector.broadcast %30 : vector<1x16xf32> to vector<256x16xf32>
    %34 = arith.addf %32, %33 : vector<256x16xf32>
    %c0_26 = arith.constant 0 : index
    %c0_27 = arith.constant 0 : index
    %35 = vector.load %arg8[%c0_26, %c0_27] : memref<256x16xf32, #tpu.memory_space<vmem>>, vector<256x16xf32>
    tpu.vector_store %arg8[%c0_26, %c0_27], %34 {strides = array<i32>} : memref<256x16xf32, #tpu.memory_space<vmem>>, vector<256x16xf32>,
    return
  }
  func.func @transform_0(%arg0: i32) -> (i32, i32) {
    %c0_i32 = arith.constant 0 : i32
    %c0_i32_0 = arith.constant 0 : i32
    return %arg0, %c0_i32 : i32, i32
  }
  func.func @transform_1(%arg0: i32) -> (i32, i32) {
    %c0_i32 = arith.constant 0 : i32
    %c0_i32_0 = arith.constant 0 : i32
    %c0_i32_1 = arith.constant 0 : i32
    return %c0_i32, %c0_i32_0 : i32, i32
  }
  func.func @transform_2(%arg0: i32) -> (i32, i32) {
    %c0_i32 = arith.constant 0 : i32
    %c0_i32_0 = arith.constant 0 : i32
    %c0_i32_1 = arith.constant 0 : i32
    return %c0_i32, %c0_i32_0 : i32, i32
  }
  func.func @transform_3(%arg0: i32) -> (i32, i32, i32) {
    %c0_i32 = arith.constant 0 : i32
    %c0_i32_0 = arith.constant 0 : i32
    %c0_i32_1 = arith.constant 0 : i32
    %c0_i32_2 = arith.constant 0 : i32
    return %c0_i32, %c0_i32_0, %c0_i32_1 : i32, i32, i32
  }
  func.func @transform_4(%arg0: i32) -> (i32, i32, i32) {
    %c0_i32 = arith.constant 0 : i32
    %c0_i32_0 = arith.constant 0 : i32
    %c0_i32_1 = arith.constant 0 : i32
    %c0_i32_2 = arith.constant 0 : i32
    return %c0_i32, %c0_i32_0, %c0_i32_1 : i32, i32, i32
  }
  func.func @transform_5(%arg0: i32) -> (i32, i32) {
    %c0_i32 = arith.constant 0 : i32
    %c0_i32_0 = arith.constant 0 : i32
    %c0_i32_1 = arith.constant 0 : i32
    return %c0_i32, %c0_i32_0 : i32, i32
  }
  func.func @transform_6(%arg0: i32) -> (i32, i32) {
    %c0_i32 = arith.constant 0 : i32
    %c0_i32_0 = arith.constant 0 : i32
    %c0_i32_1 = arith.constant 0 : i32
    return %c0_i32, %c0_i32_0 : i32, i32
  }
  func.func @transform_7(%arg0: i32) -> (i32, i32) {
    %c0_i32 = arith.constant 0 : i32
    %c0_i32_0 = arith.constant 0 : i32
    return %arg0, %c0_i32 : i32, i32
  }
}

</mosaic_0001>

<llo_original>
// kernel: tpu_custom_call.1
$region0: #{tpu_custom_call.1}
  #allocation0 [shape = 'u32[]', space=smem, size = 0x4, offset = 0x4, fixed_abs, tag = 'smem constant byte address 0x4 - core index']
  #allocation1 [shape = 'u32[144,128]{1,0:T(1,128)}', space=vmem, size = 0x12000, scoped, tag = 'internal scratch']
  %s0 = inlined_call_operand.vmem [shape: f32[256,32], index: 0, kind: input, shape index: {}]
  %s1 = inlined_call_operand.vmem [shape: bf16[32,128], index: 1, kind: input, shape index: {}]
  %s2 = inlined_call_operand.vmem [shape: f32[1,128], index: 2, kind: input, shape index: {}]
  %s3 = inlined_call_operand.vmem [shape: bf16[2,128,128], index: 3, kind: input, shape index: {}]
  %s4 = inlined_call_operand.vmem [shape: f32[2,1,128], index: 4, kind: input, shape index: {}]
  %s5 = inlined_call_operand.vmem [shape: bf16[128,16], index: 5, kind: input, shape index: {}]
  %s6 = inlined_call_operand.vmem [shape: f32[1,16], index: 6, kind: input, shape index: {}]
  %s7 = inlined_call_operand.vmem [shape: f32[256,16], index: 7, kind: output, shape index: {}]
  %s8 = sld [smem:[#allocation0]]
  $region38: #{tpu_custom_call.1} parent=0
    _
  %s10 = ssub.s32 1, %s8
  %s11 = scalar_select 0, %s10, %s8
  // Predicated region
  $region2: #{tpu_custom_call.1} parent=0 // pred_check
    _
  $region3: #{tpu_custom_call.1} parent=0 // pred_check_branch
    %13 = sbr.rel (0) target = $region5
  $region4: #{tpu_custom_call.1} parent=0 // pred_region
    _
  $region5: #{tpu_custom_call.1} parent=0 // pred_fallthru
    _
  // Predicated region
  $region6: #{tpu_custom_call.1} parent=0 // pred_check
    _
  $region7: #{tpu_custom_call.1} parent=0 // pred_check_branch
    %15 = sbr.rel (0) target = $region9
  $region8: #{tpu_custom_call.1} parent=0 // pred_region
    _
  $region9: #{tpu_custom_call.1} parent=0 // pred_fallthru
    _
  // Predicated region
  $region10: #{tpu_custom_call.1} parent=0 // pred_check
    _
  $region11: #{tpu_custom_call.1} parent=0 // pred_check_branch
    %17 = sbr.rel (0) target = $region13
  $region12: #{tpu_custom_call.1} parent=0 // pred_region
    _
  $region13: #{tpu_custom_call.1} parent=0 // pred_fallthru
    _
  // Predicated region
  $region14: #{tpu_custom_call.1} parent=0 // pred_check
    _
  $region15: #{tpu_custom_call.1} parent=0 // pred_check_branch
    %19 = sbr.rel (0) target = $region17
  $region16: #{tpu_custom_call.1} parent=0 // pred_region
    _
  $region17: #{tpu_custom_call.1} parent=0 // pred_fallthru
    _
  // Predicated region
  $region18: #{tpu_custom_call.1} parent=0 // pred_check
    _
  $region19: #{tpu_custom_call.1} parent=0 // pred_check_branch
    %21 = sbr.rel (0) target = $region21
  $region20: #{tpu_custom_call.1} parent=0 // pred_region
    _
  $region21: #{tpu_custom_call.1} parent=0 // pred_fallthru
    _
  // Predicated region
  $region22: #{tpu_custom_call.1} parent=0 // pred_check
    _
  $region23: #{tpu_custom_call.1} parent=0 // pred_check_branch
    %23 = sbr.rel (0) target = $region25
  $region24: #{tpu_custom_call.1} parent=0 // pred_region
    _
  $region25: #{tpu_custom_call.1} parent=0 // pred_fallthru
    _
  // Predicated region
  $region26: #{tpu_custom_call.1} parent=0 // pred_check
    _
  $region27: #{tpu_custom_call.1} parent=0 // pred_check_branch
    %25 = sbr.rel (0) target = $region29
  $region28: #{tpu_custom_call.1} parent=0 // pred_region
    _
  $region29: #{tpu_custom_call.1} parent=0 // pred_fallthru
    _
  %v27 = vld [vmem:[%s0] sm:$0xff]
  %v28 = vld [vmem:[%s0 + $0x8] sm:$0xff]
  %v29 = vld [vmem:[%s0 + $0x10] sm:$0xff]
  %v30 = vld [vmem:[%s0 + $0x18] sm:$0xff]
  %v31 = vld [vmem:[%s0 + $0x20] sm:$0xff]
  %v32 = vld [vmem:[%s0 + $0x28] sm:$0xff]
  %v33 = vld [vmem:[%s0 + $0x30] sm:$0xff]
  %v34 = vld [vmem:[%s0 + $0x38] sm:$0xff]
  %v35 = vld [vmem:[%s0 + $0x40] sm:$0xff]
  %v36 = vld [vmem:[%s0 + $0x48] sm:$0xff]
  %v37 = vld [vmem:[%s0 + $0x50] sm:$0xff]
  %v38 = vld [vmem:[%s0 + $0x58] sm:$0xff]
  %v39 = vld [vmem:[%s0 + $0x60] sm:$0xff]
  %v40 = vld [vmem:[%s0 + $0x68] sm:$0xff]
  %v41 = vld [vmem:[%s0 + $0x70] sm:$0xff]
  %v42 = vld [vmem:[%s0 + $0x78] sm:$0xff]
  %v43 = vld [vmem:[%s0 + $0x80] sm:$0xff]
  %v44 = vld [vmem:[%s0 + $0x88] sm:$0xff]
  %v45 = vld [vmem:[%s0 + $0x90] sm:$0xff]
  %v46 = vld [vmem:[%s0 + $0x98] sm:$0xff]
  %v47 = vld [vmem:[%s0 + $0xa0] sm:$0xff]
  %v48 = vld [vmem:[%s0 + $0xa8] sm:$0xff]
  %v49 = vld [vmem:[%s0 + $0xb0] sm:$0xff]
  %v50 = vld [vmem:[%s0 + $0xb8] sm:$0xff]
  %v51 = vld [vmem:[%s0 + $0xc0] sm:$0xff]
  %v52 = vld [vmem:[%s0 + $0xc8] sm:$0xff]
  %v53 = vld [vmem:[%s0 + $0xd0] sm:$0xff]
  %v54 = vld [vmem:[%s0 + $0xd8] sm:$0xff]
  %v55 = vld [vmem:[%s0 + $0xe0] sm:$0xff]
  %v56 = vld [vmem:[%s0 + $0xe8] sm:$0xff]
  %v57 = vld [vmem:[%s0 + $0xf0] sm:$0xff]
  %v58 = vld [vmem:[%s0 + $0xf8] sm:$0xff]
  %v59 = vld [vmem:[%s1] sm:$0xf]
  %v60 = vld [vmem:[%s1 + $0x4] sm:$0xf]
  %v61 = vld [vmem:[%s1 + $0x8] sm:$0xf]
  %v62 = vld [vmem:[%s1 + $0xc] sm:$0xf]
  %v63 = vld [vmem:[%s2] sm:$0x1]
  %v64 = vpack.c.bf16 %v28, %v27
  %v65 = vpack.c.bf16 %v30, %v29
  %v66 = vpack.c.bf16 %v32, %v31
  %v67 = vpack.c.bf16 %v34, %v33
  %v68 = vpack.c.bf16 %v36, %v35
  %v69 = vpack.c.bf16 %v38, %v37
  %v70 = vpack.c.bf16 %v40, %v39
  %v71 = vpack.c.bf16 %v42, %v41
  %v72 = vpack.c.bf16 %v44, %v43
  %v73 = vpack.c.bf16 %v46, %v45
  %v74 = vpack.c.bf16 %v48, %v47
  %v75 = vpack.c.bf16 %v50, %v49
  %v76 = vpack.c.bf16 %v52, %v51
  %v77 = vpack.c.bf16 %v54, %v53
  %v78 = vpack.c.bf16 %v56, %v55
  %v79 = vpack.c.bf16 %v58, %v57
  %v81 = vlaneseq
  %v82 = vshrl.u32 %v81, 7
  %v83 = vsub.s32 0, %v82
  %v84 = vrot.slane %v63, %v83
  %v90 = vunpack.c.l.b16 %v59
  %v91 = vunpack.c.l.b16 %v60
  %v92 = vunpack.c.l.b16 %v61
  %v93 = vunpack.c.l.b16 %v62
  %v94 = vpack.c.b16 %v91, %v90
  %v95 = vpack.c.b16 %v93, %v92
  %vm98 = vcmask 261120
  %v100 = vsel %vm98, %v64, 0
  %v103 = vsel %vm98, %v65, 0
  %v106 = vsel %vm98, %v66, 0
  %v109 = vsel %vm98, %v67, 0
  %v112 = vsel %vm98, %v68, 0
  %v115 = vsel %vm98, %v69, 0
  %v118 = vsel %vm98, %v70, 0
  %v121 = vsel %vm98, %v71, 0
  %v124 = vsel %vm98, %v72, 0
  %v127 = vsel %vm98, %v73, 0
  %v130 = vsel %vm98, %v74, 0
  %v133 = vsel %vm98, %v75, 0
  %v136 = vsel %vm98, %v76, 0
  %v139 = vsel %vm98, %v77, 0
  %v142 = vsel %vm98, %v78, 0
  %v145 = vsel %vm98, %v79, 0
  %147 = vmatprep.subr.bf16.mxu0 0
  %148 = vmatpush1.bf16.msra.mxu0 %v94
  %149 = vmatprep.subr.bf16.mxu0 0
  %150 = vmatpush1.bf16.msra.mxu0 %v95
  %151 = vmatprep.subr.bf16.mxu0 0
  %152 = vmatpush1.bf16.msra.mxu0 0
  %153 = vmatprep.subr.bf16.mxu0 0
  %154 = vmatpush1.bf16.msra.mxu0 0
  %155 = vmatprep.subr.bf16.mxu0 0
  %156 = vmatpush1.bf16.msra.mxu0 0
  %157 = vmatprep.subr.bf16.mxu0 0
  %158 = vmatpush1.bf16.msra.mxu0 0
  %159 = vmatprep.subr.bf16.mxu0 0
  %160 = vmatpush1.bf16.msra.mxu0 0
  %161 = vmatprep.subr.bf16.mxu0 0
  %162 = vmatpush1.bf16.msra.mxu0 0
  %163 = vmatprep.subr.bf16.mxu0 0
  %164 = vmatpush1.bf16.msra.mxu0 0
  %165 = vmatprep.subr.bf16.mxu0 0
  %166 = vmatpush1.bf16.msra.mxu0 0
  %167 = vmatprep.subr.bf16.mxu0 0
  %168 = vmatpush1.bf16.msra.mxu0 0
  %169 = vmatprep.subr.bf16.mxu0 0
  %170 = vmatpush1.bf16.msra.mxu0 0
  %171 = vmatprep.subr.bf16.mxu0 0
  %172 = vmatpush1.bf16.msra.mxu0 0
  %173 = vmatprep.subr.bf16.mxu0 0
  %174 = vmatpush1.bf16.msra.mxu0 0
  %175 = vmatprep.subr.bf16.mxu0 0
  %176 = vmatpush1.bf16.msra.mxu0 0
  %177 = vmatprep.subr.bf16.mxu0 0
  %178 = vmatpush1.bf16.msra.mxu0 0
  %179 = vmatprep.mubr.bf16.mxu0 0
  %180 = vmatmul.mubr.bf16.gmra.mrb[0].mxu0 %v100
  %v181 = vpop.f32.mrb[0].mxu0
  %v182 = vadd.f32 %v84, %v181
  %v183 = vpop.f32.mrb[0].mxu0
  %v184 = vpop.f32.mrb[0].mxu0
  %v185 = vadd.f32 %v84, %v184
  %v186 = vpop.f32.mrb[0].mxu0
  %187 = vmatprep.mubr.bf16.mxu0 0
  %188 = vmatmul.mubr.bf16.gmra.mrb[0].mxu0 %v103
  %v189 = vpop.f32.mrb[0].mxu0
  %v190 = vadd.f32 %v84, %v189
  %v191 = vpop.f32.mrb[0].mxu0
  %v192 = vpop.f32.mrb[0].mxu0
  %v193 = vadd.f32 %v84, %v192
  %v194 = vpop.f32.mrb[0].mxu0
  %195 = vmatprep.mubr.bf16.mxu0 0
  %196 = vmatmul.mubr.bf16.gmra.mrb[0].mxu0 %v106
  %v197 = vpop.f32.mrb[0].mxu0
  %v198 = vadd.f32 %v84, %v197
  %v199 = vpop.f32.mrb[0].mxu0
  %v200 = vpop.f32.mrb[0].mxu0
  %v201 = vadd.f32 %v84, %v200
  %v202 = vpop.f32.mrb[0].mxu0
  %203 = vmatprep.mubr.bf16.mxu0 0
  %204 = vmatmul.mubr.bf16.gmra.mrb[0].mxu0 %v109
  %v205 = vpop.f32.mrb[0].mxu0
  %v206 = vadd.f32 %v84, %v205
  %v207 = vpop.f32.mrb[0].mxu0
  %v208 = vpop.f32.mrb[0].mxu0
  %v209 = vadd.f32 %v84, %v208
  %v210 = vpop.f32.mrb[0].mxu0
  %211 = vmatprep.mubr.bf16.mxu0 0
  %212 = vmatmul.mubr.bf16.gmra.mrb[0].mxu0 %v112
  %v213 = vpop.f32.mrb[0].mxu0
  %v214 = vadd.f32 %v84, %v213
  %v215 = vpop.f32.mrb[0].mxu0
  %v216 = vpop.f32.mrb[0].mxu0
  %v217 = vadd.f32 %v84, %v216
  %v218 = vpop.f32.mrb[0].mxu0
  %219 = vmatprep.mubr.bf16.mxu0 0
  %220 = vmatmul.mubr.bf16.gmra.mrb[0].mxu0 %v115
  %v221 = vpop.f32.mrb[0].mxu0
  %v222 = vadd.f32 %v84, %v221
  %v223 = vpop.f32.mrb[0].mxu0
  %v224 = vpop.f32.mrb[0].mxu0
  %v225 = vadd.f32 %v84, %v224
  %v226 = vpop.f32.mrb[0].mxu0
  %227 = vmatprep.mubr.bf16.mxu0 0
  %228 = vmatmul.mubr.bf16.gmra.mrb[0].mxu0 %v118
  %v229 = vpop.f32.mrb[0].mxu0
  %v230 = vadd.f32 %v84, %v229
  %v231 = vpop.f32.mrb[0].mxu0
  %v232 = vpop.f32.mrb[0].mxu0
  %v233 = vadd.f32 %v84, %v232
  %v234 = vpop.f32.mrb[0].mxu0
  %235 = vmatprep.mubr.bf16.mxu0 0
  %236 = vmatmul.mubr.bf16.gmra.mrb[0].mxu0 %v121
  %v237 = vpop.f32.mrb[0].mxu0
  %v238 = vadd.f32 %v84, %v237
  %v239 = vpop.f32.mrb[0].mxu0
  %v240 = vpop.f32.mrb[0].mxu0
  %v241 = vadd.f32 %v84, %v240
  %v242 = vpop.f32.mrb[0].mxu0
  %243 = vmatprep.mubr.bf16.mxu0 0
  %244 = vmatmul.mubr.bf16.gmra.mrb[0].mxu0 %v124
  %v245 = vpop.f32.mrb[0].mxu0
  %v246 = vadd.f32 %v84, %v245
  %v247 = vpop.f32.mrb[0].mxu0
  %v248 = vpop.f32.mrb[0].mxu0
  %v249 = vadd.f32 %v84, %v248
  %v250 = vpop.f32.mrb[0].mxu0
  %251 = vmatprep.mubr.bf16.mxu0 0
  %252 = vmatmul.mubr.bf16.gmra.mrb[0].mxu0 %v127
  %v253 = vpop.f32.mrb[0].mxu0
  %v254 = vadd.f32 %v84, %v253
  %v255 = vpop.f32.mrb[0].mxu0
  %v256 = vpop.f32.mrb[0].mxu0
  %v257 = vadd.f32 %v84, %v256
  %v258 = vpop.f32.mrb[0].mxu0
  %259 = vmatprep.mubr.bf16.mxu0 0
  %260 = vmatmul.mubr.bf16.gmra.mrb[0].mxu0 %v130
  %v261 = vpop.f32.mrb[0].mxu0
  %v262 = vadd.f32 %v84, %v261
  %v263 = vpop.f32.mrb[0].mxu0
  %v264 = vpop.f32.mrb[0].mxu0
  %v265 = vadd.f32 %v84, %v264
  %v266 = vpop.f32.mrb[0].mxu0
  %267 = vmatprep.mubr.bf16.mxu0 0
  %268 = vmatmul.mubr.bf16.gmra.mrb[0].mxu0 %v133
  %v269 = vpop.f32.mrb[0].mxu0
  %v270 = vadd.f32 %v84, %v269
  %v271 = vpop.f32.mrb[0].mxu0
  %v272 = vpop.f32.mrb[0].mxu0
  %v273 = vadd.f32 %v84, %v272
  %v274 = vpop.f32.mrb[0].mxu0
  %275 = vmatprep.mubr.bf16.mxu0 0
  %276 = vmatmul.mubr.bf16.gmra.mrb[0].mxu0 %v136
  %v277 = vpop.f32.mrb[0].mxu0
  %v278 = vadd.f32 %v84, %v277
  %v279 = vpop.f32.mrb[0].mxu0
  %v280 = vpop.f32.mrb[0].mxu0
  %v281 = vadd.f32 %v84, %v280
  %v282 = vpop.f32.mrb[0].mxu0
  %283 = vmatprep.mubr.bf16.mxu0 0
  %284 = vmatmul.mubr.bf16.gmra.mrb[0].mxu0 %v139
  %v285 = vpop.f32.mrb[0].mxu0
  %v286 = vadd.f32 %v84, %v285
  %v287 = vpop.f32.mrb[0].mxu0
  %v288 = vpop.f32.mrb[0].mxu0
  %v289 = vadd.f32 %v84, %v288
  %v290 = vpop.f32.mrb[0].mxu0
  %291 = vmatprep.mubr.bf16.mxu0 0
  %292 = vmatmul.mubr.bf16.gmra.mrb[0].mxu0 %v142
  %v293 = vpop.f32.mrb[0].mxu0
  %v294 = vadd.f32 %v84, %v293
  %v295 = vpop.f32.mrb[0].mxu0
  %v296 = vpop.f32.mrb[0].mxu0
  %v297 = vadd.f32 %v84, %v296
  %v298 = vpop.f32.mrb[0].mxu0
  %299 = vmatprep.mubr.bf16.mxu0 0
  %300 = vmatmul.mubr.bf16.gmra.mrb[0].mxu0 %v145
  %v301 = vpop.f32.mrb[0].mxu0
  %v302 = vadd.f32 %v84, %v301
  %v303 = vpop.f32.mrb[0].mxu0
  %v304 = vpop.f32.mrb[0].mxu0
  %v305 = vadd.f32 %v84, %v304
  %v306 = vpop.f32.mrb[0].mxu0
  %307 = vdwg.mxu0
  %v308 = vmax.f32 %v182, 0.0
  %v309 = vmax.f32 %v185, 0.0
  %v310 = vmax.f32 %v190, 0.0
  %v311 = vmax.f32 %v193, 0.0
  %v312 = vmax.f32 %v198, 0.0
  %v313 = vmax.f32 %v201, 0.0
  %v314 = vmax.f32 %v206, 0.0
  %v315 = vmax.f32 %v209, 0.0
  %v316 = vmax.f32 %v214, 0.0
  %v317 = vmax.f32 %v217, 0.0
  %v318 = vmax.f32 %v222, 0.0
  %v319 = vmax.f32 %v225, 0.0
  %v320 = vmax.f32 %v230, 0.0
  %v321 = vmax.f32 %v233, 0.0
  %v322 = vmax.f32 %v238, 0.0
  %v323 = vmax.f32 %v241, 0.0
  %v324 = vmax.f32 %v246, 0.0
  %v325 = vmax.f32 %v249, 0.0
  %v326 = vmax.f32 %v254, 0.0
  %v327 = vmax.f32 %v257, 0.0
  %v328 = vmax.f32 %v262, 0.0
  %v329 = vmax.f32 %v265, 0.0
  %v330 = vmax.f32 %v270, 0.0
  %v331 = vmax.f32 %v273, 0.0
  %v332 = vmax.f32 %v278, 0.0
  %v333 = vmax.f32 %v281, 0.0
  %v334 = vmax.f32 %v286, 0.0
  %v335 = vmax.f32 %v289, 0.0
  %v336 = vmax.f32 %v294, 0.0
  %v337 = vmax.f32 %v297, 0.0
  %v338 = vmax.f32 %v302, 0.0
  %v339 = vmax.f32 %v305, 0.0
  %v340 = vld [vmem:[%s3] sm:$0xf]
  %v341 = vld [vmem:[%s3 + $0x4] sm:$0xf]
  %v342 = vld [vmem:[%s3 + $0x8] sm:$0xf]
  %v343 = vld [vmem:[%s3 + $0xc] sm:$0xf]
  %v344 = vld [vmem:[%s3 + $0x10] sm:$0xf]
  %v345 = vld [vmem:[%s3 + $0x14] sm:$0xf]
  %v346 = vld [vmem:[%s3 + $0x18] sm:$0xf]
  %v347 = vld [vmem:[%s3 + $0x1c] sm:$0xf]
  %v348 = vld [vmem:[%s3 + $0x20] sm:$0xf]
  %v349 = vld [vmem:[%s3 + $0x24] sm:$0xf]
  %v350 = vld [vmem:[%s3 + $0x28] sm:$0xf]
  %v351 = vld [vmem:[%s3 + $0x2c] sm:$0xf]
  %v352 = vld [vmem:[%s3 + $0x30] sm:$0xf]
  %v353 = vld [vmem:[%s3 + $0x34] sm:$0xf]
  %v354 = vld [vmem:[%s3 + $0x38] sm:$0xf]
  %v355 = vld [vmem:[%s3 + $0x3c] sm:$0xf]
  %v356 = vld [vmem:[%s4] sm:$0x1]
  %v357 = vpack.c.bf16 %v309, %v308
  %v358 = vpack.c.bf16 %v311, %v310
  %v359 = vpack.c.bf16 %v313, %v312
  %v360 = vpack.c.bf16 %v315, %v314
  %v361 = vpack.c.bf16 %v317, %v316
  %v362 = vpack.c.bf16 %v319, %v318
  %v363 = vpack.c.bf16 %v321, %v320
  %v364 = vpack.c.bf16 %v323, %v322
  %v365 = vpack.c.bf16 %v325, %v324
  %v366 = vpack.c.bf16 %v327, %v326
  %v367 = vpack.c.bf16 %v329, %v328
  %v368 = vpack.c.bf16 %v331, %v330
  %v369 = vpack.c.bf16 %v333, %v332
  %v370 = vpack.c.bf16 %v335, %v334
  %v371 = vpack.c.bf16 %v337, %v336
  %v372 = vpack.c.bf16 %v339, %v338
  %v374 = vlaneseq
  %v375 = vshrl.u32 %v374, 7
  %v376 = vsub.s32 0, %v375
  %v377 = vrot.slane %v356, %v376
  %v395 = vunpack.c.l.b16 %v340
  %v396 = vunpack.c.l.b16 %v341
  %v397 = vunpack.c.l.b16 %v342
  %v398 = vunpack.c.l.b16 %v343
  %v399 = vunpack.c.l.b16 %v344
  %v400 = vunpack.c.l.b16 %v345
  %v401 = vunpack.c.l.b16 %v346
  %v402 = vunpack.c.l.b16 %v347
  %v403 = vunpack.c.l.b16 %v348
  %v404 = vunpack.c.l.b16 %v349
  %v405 = vunpack.c.l.b16 %v350
  %v406 = vunpack.c.l.b16 %v351
  %v407 = vunpack.c.l.b16 %v352
  %v408 = vunpack.c.l.b16 %v353
  %v409 = vunpack.c.l.b16 %v354
  %v410 = vunpack.c.l.b16 %v355
  %v411 = vpack.c.b16 %v396, %v395
  %v412 = vpack.c.b16 %v398, %v397
  %v413 = vpack.c.b16 %v400, %v399
  %v414 = vpack.c.b16 %v402, %v401
  %v415 = vpack.c.b16 %v404, %v403
  %v416 = vpack.c.b16 %v406, %v405
  %v417 = vpack.c.b16 %v408, %v407
  %v418 = vpack.c.b16 %v410, %v409
  %427 = vmatprep.subr.bf16.mxu0 0
  %428 = vmatpush1.bf16.msra.mxu0 %v411
  %429 = vmatprep.subr.bf16.mxu0 0
  %430 = vmatpush1.bf16.msra.mxu0 %v412
  %431 = vmatprep.subr.bf16.mxu0 0
  %432 = vmatpush1.bf16.msra.mxu0 %v413
  %433 = vmatprep.subr.bf16.mxu0 0
  %434 = vmatpush1.bf16.msra.mxu0 %v414
  %435 = vmatprep.subr.bf16.mxu0 0
  %436 = vmatpush1.bf16.msra.mxu0 %v415
  %437 = vmatprep.subr.bf16.mxu0 0
  %438 = vmatpush1.bf16.msra.mxu0 %v416
  %439 = vmatprep.subr.bf16.mxu0 0
  %440 = vmatpush1.bf16.msra.mxu0 %v417
  %441 = vmatprep.subr.bf16.mxu0 0
  %442 = vmatpush1.bf16.msra.mxu0 %v418
  %443 = vmatprep.subr.bf16.mxu0 0
  %444 = vmatpush1.bf16.msra.mxu0 0
  %445 = vmatprep.subr.bf16.mxu0 0
  %446 = vmatpush1.bf16.msra.mxu0 0
  %447 = vmatprep.subr.bf16.mxu0 0
  %448 = vmatpush1.bf16.msra.mxu0 0
  %449 = vmatprep.subr.bf16.mxu0 0
  %450 = vmatpush1.bf16.msra.mxu0 0
  %451 = vmatprep.subr.bf16.mxu0 0
  %452 = vmatpush1.bf16.msra.mxu0 0
  %453 = vmatprep.subr.bf16.mxu0 0
  %454 = vmatpush1.bf16.msra.mxu0 0
  %455 = vmatprep.subr.bf16.mxu0 0
  %456 = vmatpush1.bf16.msra.mxu0 0
  %457 = vmatprep.subr.bf16.mxu0 0
  %458 = vmatpush1.bf16.msra.mxu0 0
  %459 = vmatprep.mubr.bf16.mxu0 0
  %460 = vmatmul.mubr.bf16.gmra.mrb[0].mxu0 %v357
  %v461 = vpop.f32.mrb[0].mxu0
  %v462 = vadd.f32 %v377, %v461
  %v463 = vpop.f32.mrb[0].mxu0
  %v464 = vpop.f32.mrb[0].mxu0
  %v465 = vadd.f32 %v377, %v464
  %v466 = vpop.f32.mrb[0].mxu0
  %467 = vmatprep.mubr.bf16.mxu0 0
  %468 = vmatmul.mubr.bf16.gmra.mrb[0].mxu0 %v358
  %v469 = vpop.f32.mrb[0].mxu0
  %v470 = vadd.f32 %v377, %v469
  %v471 = vpop.f32.mrb[0].mxu0
  %v472 = vpop.f32.mrb[0].mxu0
  %v473 = vadd.f32 %v377, %v472
  %v474 = vpop.f32.mrb[0].mxu0
  %475 = vmatprep.mubr.bf16.mxu0 0
  %476 = vmatmul.mubr.bf16.gmra.mrb[0].mxu0 %v359
  %v477 = vpop.f32.mrb[0].mxu0
  %v478 = vadd.f32 %v377, %v477
  %v479 = vpop.f32.mrb[0].mxu0
  %v480 = vpop.f32.mrb[0].mxu0
  %v481 = vadd.f32 %v377, %v480
  %v482 = vpop.f32.mrb[0].mxu0
  %483 = vmatprep.mubr.bf16.mxu0 0
  %484 = vmatmul.mubr.bf16.gmra.mrb[0].mxu0 %v360
  %v485 = vpop.f32.mrb[0].mxu0
  %v486 = vadd.f32 %v377, %v485
  %v487 = vpop.f32.mrb[0].mxu0
  %v488 = vpop.f32.mrb[0].mxu0
  %v489 = vadd.f32 %v377, %v488
  %v490 = vpop.f32.mrb[0].mxu0
  %491 = vmatprep.mubr.bf16.mxu0 0
  %492 = vmatmul.mubr.bf16.gmra.mrb[0].mxu0 %v361
  %v493 = vpop.f32.mrb[0].mxu0
  %v494 = vadd.f32 %v377, %v493
  %v495 = vpop.f32.mrb[0].mxu0
  %v496 = vpop.f32.mrb[0].mxu0
  %v497 = vadd.f32 %v377, %v496
  %v498 = vpop.f32.mrb[0].mxu0
  %499 = vmatprep.mubr.bf16.mxu0 0
  %500 = vmatmul.mubr.bf16.gmra.mrb[0].mxu0 %v362
  %v501 = vpop.f32.mrb[0].mxu0
  %v502 = vadd.f32 %v377, %v501
  %v503 = vpop.f32.mrb[0].mxu0
  %v504 = vpop.f32.mrb[0].mxu0
  %v505 = vadd.f32 %v377, %v504
  %v506 = vpop.f32.mrb[0].mxu0
  %507 = vmatprep.mubr.bf16.mxu0 0
  %508 = vmatmul.mubr.bf16.gmra.mrb[0].mxu0 %v363
  %v509 = vpop.f32.mrb[0].mxu0
  %v510 = vadd.f32 %v377, %v509
  %v511 = vpop.f32.mrb[0].mxu0
  %v512 = vpop.f32.mrb[0].mxu0
  %v513 = vadd.f32 %v377, %v512
  %v514 = vpop.f32.mrb[0].mxu0
  %515 = vmatprep.mubr.bf16.mxu0 0
  %516 = vmatmul.mubr.bf16.gmra.mrb[0].mxu0 %v364
  %v517 = vpop.f32.mrb[0].mxu0
  %v518 = vadd.f32 %v377, %v517
  %v519 = vpop.f32.mrb[0].mxu0
  %v520 = vpop.f32.mrb[0].mxu0
  %v521 = vadd.f32 %v377, %v520
  %v522 = vpop.f32.mrb[0].mxu0
  %523 = vmatprep.mubr.bf16.mxu0 0
  %524 = vmatmul.mubr.bf16.gmra.mrb[0].mxu0 %v365
  %v525 = vpop.f32.mrb[0].mxu0
  %v526 = vadd.f32 %v377, %v525
  %v527 = vpop.f32.mrb[0].mxu0
  %v528 = vpop.f32.mrb[0].mxu0
  %v529 = vadd.f32 %v377, %v528
  %v530 = vpop.f32.mrb[0].mxu0
  %531 = vmatprep.mubr.bf16.mxu0 0
  %532 = vmatmul.mubr.bf16.gmra.mrb[0].mxu0 %v366
  %v533 = vpop.f32.mrb[0].mxu0
  %v534 = vadd.f32 %v377, %v533
  %v535 = vpop.f32.mrb[0].mxu0
  %v536 = vpop.f32.mrb[0].mxu0
  %v537 = vadd.f32 %v377, %v536
  %v538 = vpop.f32.mrb[0].mxu0
  %539 = vmatprep.mubr.bf16.mxu0 0
  %540 = vmatmul.mubr.bf16.gmra.mrb[0].mxu0 %v367
  %v541 = vpop.f32.mrb[0].mxu0
  %v542 = vadd.f32 %v377, %v541
  %v543 = vpop.f32.mrb[0].mxu0
  %v544 = vpop.f32.mrb[0].mxu0
  %v545 = vadd.f32 %v377, %v544
  %v546 = vpop.f32.mrb[0].mxu0
  %547 = vmatprep.mubr.bf16.mxu0 0
  %548 = vmatmul.mubr.bf16.gmra.mrb[0].mxu0 %v368
  %v549 = vpop.f32.mrb[0].mxu0
  %v550 = vadd.f32 %v377, %v549
  %v551 = vpop.f32.mrb[0].mxu0
  %v552 = vpop.f32.mrb[0].mxu0
  %v553 = vadd.f32 %v377, %v552
  %v554 = vpop.f32.mrb[0].mxu0
  %555 = vmatprep.mubr.bf16.mxu0 0
  %556 = vmatmul.mubr.bf16.gmra.mrb[0].mxu0 %v369
  %v557 = vpop.f32.mrb[0].mxu0
  %v558 = vadd.f32 %v377, %v557
  %v559 = vpop.f32.mrb[0].mxu0
  %v560 = vpop.f32.mrb[0].mxu0
  %v561 = vadd.f32 %v377, %v560
  %v562 = vpop.f32.mrb[0].mxu0
  %563 = vmatprep.mubr.bf16.mxu0 0
  %564 = vmatmul.mubr.bf16.gmra.mrb[0].mxu0 %v370
  %v565 = vpop.f32.mrb[0].mxu0
  %v566 = vadd.f32 %v377, %v565
  %v567 = vpop.f32.mrb[0].mxu0
  %v568 = vpop.f32.mrb[0].mxu0
  %v569 = vadd.f32 %v377, %v568
  %v570 = vpop.f32.mrb[0].mxu0
  %571 = vmatprep.mubr.bf16.mxu0 0
  %572 = vmatmul.mubr.bf16.gmra.mrb[0].mxu0 %v371
  %v573 = vpop.f32.mrb[0].mxu0
  %v574 = vadd.f32 %v377, %v573
  %v575 = vpop.f32.mrb[0].mxu0
  %v576 = vpop.f32.mrb[0].mxu0
  %v577 = vadd.f32 %v377, %v576
  %v578 = vpop.f32.mrb[0].mxu0
  %579 = vmatprep.mubr.bf16.mxu0 0
  %580 = vmatmul.mubr.bf16.gmra.mrb[0].mxu0 %v372
  %v581 = vpop.f32.mrb[0].mxu0
  %v582 = vadd.f32 %v377, %v581
  %v583 = vpop.f32.mrb[0].mxu0
  %v584 = vpop.f32.mrb[0].mxu0
  %v585 = vadd.f32 %v377, %v584
  %v586 = vpop.f32.mrb[0].mxu0
  %587 = vdwg.mxu0
  %v588 = vmax.f32 %v462, 0.0
  %v589 = vmax.f32 %v465, 0.0
  %v590 = vmax.f32 %v470, 0.0
  %v591 = vmax.f32 %v473, 0.0
  %v592 = vmax.f32 %v478, 0.0
  %v593 = vmax.f32 %v481, 0.0
  %v594 = vmax.f32 %v486, 0.0
  %v595 = vmax.f32 %v489, 0.0
  %v596 = vmax.f32 %v494, 0.0
  %v597 = vmax.f32 %v497, 0.0
  %v598 = vmax.f32 %v502, 0.0
  %v599 = vmax.f32 %v505, 0.0
  %v600 = vmax.f32 %v510, 0.0
  %v601 = vmax.f32 %v513, 0.0
  %v602 = vmax.f32 %v518, 0.0
  %v603 = vmax.f32 %v521, 0.0
  %v604 = vmax.f32 %v526, 0.0
  %v605 = vmax.f32 %v529, 0.0
  %v606 = vmax.f32 %v534, 0.0
  %v607 = vmax.f32 %v537, 0.0
  %v608 = vmax.f32 %v542, 0.0
  %v609 = vmax.f32 %v545, 0.0
  %v610 = vmax.f32 %v550, 0.0
  %v611 = vmax.f32 %v553, 0.0
  %v612 = vmax.f32 %v558, 0.0
  %v613 = vmax.f32 %v561, 0.0
  %v614 = vmax.f32 %v566, 0.0
  %v615 = vmax.f32 %v569, 0.0
  %v616 = vmax.f32 %v574, 0.0
  %v617 = vmax.f32 %v577, 0.0
  %v618 = vmax.f32 %v582, 0.0
  %v619 = vmax.f32 %v585, 0.0
  %s620 = scalar_lea.vmem %s3, 64
  %v621 = vld [vmem:[%s620] sm:$0xf]
  %v622 = vld [vmem:[%s620 + $0x4] sm:$0xf]
  %v623 = vld [vmem:[%s620 + $0x8] sm:$0xf]
  %v624 = vld [vmem:[%s620 + $0xc] sm:$0xf]
  %v625 = vld [vmem:[%s620 + $0x10] sm:$0xf]
  %v626 = vld [vmem:[%s620 + $0x14] sm:$0xf]
  %v627 = vld [vmem:[%s620 + $0x18] sm:$0xf]
  %v628 = vld [vmem:[%s620 + $0x1c] sm:$0xf]
  %v629 = vld [vmem:[%s620 + $0x20] sm:$0xf]
  %v630 = vld [vmem:[%s620 + $0x24] sm:$0xf]
  %v631 = vld [vmem:[%s620 + $0x28] sm:$0xf]
  %v632 = vld [vmem:[%s620 + $0x2c] sm:$0xf]
  %v633 = vld [vmem:[%s620 + $0x30] sm:$0xf]
  %v634 = vld [vmem:[%s620 + $0x34] sm:$0xf]
  %v635 = vld [vmem:[%s620 + $0x38] sm:$0xf]
  %v636 = vld [vmem:[%s620 + $0x3c] sm:$0xf]
  %s637 = scalar_lea.vmem %s4, 1
  %v638 = vld [vmem:[%s637] sm:$0x1]
  %v639 = vpack.c.bf16 %v589, %v588
  %v640 = vpack.c.bf16 %v591, %v590
  %v641 = vpack.c.bf16 %v593, %v592
  %v642 = vpack.c.bf16 %v595, %v594
  %v643 = vpack.c.bf16 %v597, %v596
  %v644 = vpack.c.bf16 %v599, %v598
  %v645 = vpack.c.bf16 %v601, %v600
  %v646 = vpack.c.bf16 %v603, %v602
  %v647 = vpack.c.bf16 %v605, %v604
  %v648 = vpack.c.bf16 %v607, %v606
  %v649 = vpack.c.bf16 %v609, %v608
  %v650 = vpack.c.bf16 %v611, %v610
  %v651 = vpack.c.bf16 %v613, %v612
  %v652 = vpack.c.bf16 %v615, %v614
  %v653 = vpack.c.bf16 %v617, %v616
  %v654 = vpack.c.bf16 %v619, %v618
  %v656 = vlaneseq
  %v657 = vshrl.u32 %v656, 7
  %v658 = vsub.s32 0, %v657
  %v659 = vrot.slane %v638, %v658
  %v677 = vunpack.c.l.b16 %v621
  %v678 = vunpack.c.l.b16 %v622
  %v679 = vunpack.c.l.b16 %v623
  %v680 = vunpack.c.l.b16 %v624
  %v681 = vunpack.c.l.b16 %v625
  %v682 = vunpack.c.l.b16 %v626
  %v683 = vunpack.c.l.b16 %v627
  %v684 = vunpack.c.l.b16 %v628
  %v685 = vunpack.c.l.b16 %v629
  %v686 = vunpack.c.l.b16 %v630
  %v687 = vunpack.c.l.b16 %v631
  %v688 = vunpack.c.l.b16 %v632
  %v689 = vunpack.c.l.b16 %v633
  %v690 = vunpack.c.l.b16 %v634
  %v691 = vunpack.c.l.b16 %v635
  %v692 = vunpack.c.l.b16 %v636
  %v693 = vpack.c.b16 %v678, %v677
  %v694 = vpack.c.b16 %v680, %v679
  %v695 = vpack.c.b16 %v682, %v681
  %v696 = vpack.c.b16 %v684, %v683
  %v697 = vpack.c.b16 %v686, %v685
  %v698 = vpack.c.b16 %v688, %v687
  %v699 = vpack.c.b16 %v690, %v689
  %v700 = vpack.c.b16 %v692, %v691
  %709 = vmatprep.subr.bf16.mxu0 0
  %710 = vmatpush1.bf16.msra.mxu0 %v693
  %711 = vmatprep.subr.bf16.mxu0 0
  %712 = vmatpush1.bf16.msra.mxu0 %v694
  %713 = vmatprep.subr.bf16.mxu0 0
  %714 = vmatpush1.bf16.msra.mxu0 %v695
  %715 = vmatprep.subr.bf16.mxu0 0
  %716 = vmatpush1.bf16.msra.mxu0 %v696
  %717 = vmatprep.subr.bf16.mxu0 0
  %718 = vmatpush1.bf16.msra.mxu0 %v697
  %719 = vmatprep.subr.bf16.mxu0 0
  %720 = vmatpush1.bf16.msra.mxu0 %v698
  %721 = vmatprep.subr.bf16.mxu0 0
  %722 = vmatpush1.bf16.msra.mxu0 %v699
  %723 = vmatprep.subr.bf16.mxu0 0
  %724 = vmatpush1.bf16.msra.mxu0 %v700
  %725 = vmatprep.subr.bf16.mxu0 0
  %726 = vmatpush1.bf16.msra.mxu0 0
  %727 = vmatprep.subr.bf16.mxu0 0
  %728 = vmatpush1.bf16.msra.mxu0 0
  %729 = vmatprep.subr.bf16.mxu0 0
  %730 = vmatpush1.bf16.msra.mxu0 0
  %731 = vmatprep.subr.bf16.mxu0 0
  %732 = vmatpush1.bf16.msra.mxu0 0
  %733 = vmatprep.subr.bf16.mxu0 0
  %734 = vmatpush1.bf16.msra.mxu0 0
  %735 = vmatprep.subr.bf16.mxu0 0
  %736 = vmatpush1.bf16.msra.mxu0 0
  %737 = vmatprep.subr.bf16.mxu0 0
  %738 = vmatpush1.bf16.msra.mxu0 0
  %739 = vmatprep.subr.bf16.mxu0 0
  %740 = vmatpush1.bf16.msra.mxu0 0
  %741 = vmatprep.mubr.bf16.mxu0 0
  %742 = vmatmul.mubr.bf16.gmra.mrb[0].mxu0 %v639
  %v743 = vpop.f32.mrb[0].mxu0
  %v744 = vadd.f32 %v659, %v743
  %v745 = vpop.f32.mrb[0].mxu0
  %v746 = vpop.f32.mrb[0].mxu0
  %v747 = vadd.f32 %v659, %v746
  %v748 = vpop.f32.mrb[0].mxu0
  %749 = vmatprep.mubr.bf16.mxu0 0
  %750 = vmatmul.mubr.bf16.gmra.mrb[0].mxu0 %v640
  %v751 = vpop.f32.mrb[0].mxu0
  %v752 = vadd.f32 %v659, %v751
  %v753 = vpop.f32.mrb[0].mxu0
  %v754 = vpop.f32.mrb[0].mxu0
  %v755 = vadd.f32 %v659, %v754
  %v756 = vpop.f32.mrb[0].mxu0
  %757 = vmatprep.mubr.bf16.mxu0 0
  %758 = vmatmul.mubr.bf16.gmra.mrb[0].mxu0 %v641
  %v759 = vpop.f32.mrb[0].mxu0
  %v760 = vadd.f32 %v659, %v759
  %v761 = vpop.f32.mrb[0].mxu0
  %v762 = vpop.f32.mrb[0].mxu0
  %v763 = vadd.f32 %v659, %v762
  %v764 = vpop.f32.mrb[0].mxu0
  %765 = vmatprep.mubr.bf16.mxu0 0
  %766 = vmatmul.mubr.bf16.gmra.mrb[0].mxu0 %v642
  %v767 = vpop.f32.mrb[0].mxu0
  %v768 = vadd.f32 %v659, %v767
  %v769 = vpop.f32.mrb[0].mxu0
  %v770 = vpop.f32.mrb[0].mxu0
  %v771 = vadd.f32 %v659, %v770
  %v772 = vpop.f32.mrb[0].mxu0
  %773 = vmatprep.mubr.bf16.mxu0 0
  %774 = vmatmul.mubr.bf16.gmra.mrb[0].mxu0 %v643
  %v775 = vpop.f32.mrb[0].mxu0
  %v776 = vadd.f32 %v659, %v775
  %v777 = vpop.f32.mrb[0].mxu0
  %v778 = vpop.f32.mrb[0].mxu0
  %v779 = vadd.f32 %v659, %v778
  %v780 = vpop.f32.mrb[0].mxu0
  %781 = vmatprep.mubr.bf16.mxu0 0
  %782 = vmatmul.mubr.bf16.gmra.mrb[0].mxu0 %v644
  %v783 = vpop.f32.mrb[0].mxu0
  %v784 = vadd.f32 %v659, %v783
  %v785 = vpop.f32.mrb[0].mxu0
  %v786 = vpop.f32.mrb[0].mxu0
  %v787 = vadd.f32 %v659, %v786
  %v788 = vpop.f32.mrb[0].mxu0
  %789 = vmatprep.mubr.bf16.mxu0 0
  %790 = vmatmul.mubr.bf16.gmra.mrb[0].mxu0 %v645
  %v791 = vpop.f32.mrb[0].mxu0
  %v792 = vadd.f32 %v659, %v791
  %v793 = vpop.f32.mrb[0].mxu0
  %v794 = vpop.f32.mrb[0].mxu0
  %v795 = vadd.f32 %v659, %v794
  %v796 = vpop.f32.mrb[0].mxu0
  %797 = vmatprep.mubr.bf16.mxu0 0
  %798 = vmatmul.mubr.bf16.gmra.mrb[0].mxu0 %v646
  %v799 = vpop.f32.mrb[0].mxu0
  %v800 = vadd.f32 %v659, %v799
  %v801 = vpop.f32.mrb[0].mxu0
  %v802 = vpop.f32.mrb[0].mxu0
  %v803 = vadd.f32 %v659, %v802
  %v804 = vpop.f32.mrb[0].mxu0
  %805 = vmatprep.mubr.bf16.mxu0 0
  %806 = vmatmul.mubr.bf16.gmra.mrb[0].mxu0 %v647
  %v807 = vpop.f32.mrb[0].mxu0
  %v808 = vadd.f32 %v659, %v807
  %v809 = vpop.f32.mrb[0].mxu0
  %v810 = vpop.f32.mrb[0].mxu0
  %v811 = vadd.f32 %v659, %v810
  %v812 = vpop.f32.mrb[0].mxu0
  %813 = vmatprep.mubr.bf16.mxu0 0
  %814 = vmatmul.mubr.bf16.gmra.mrb[0].mxu0 %v648
  %v815 = vpop.f32.mrb[0].mxu0
  %v816 = vadd.f32 %v659, %v815
  %v817 = vpop.f32.mrb[0].mxu0
  %v818 = vpop.f32.mrb[0].mxu0
  %v819 = vadd.f32 %v659, %v818
  %v820 = vpop.f32.mrb[0].mxu0
  %821 = vmatprep.mubr.bf16.mxu0 0
  %822 = vmatmul.mubr.bf16.gmra.mrb[0].mxu0 %v649
  %v823 = vpop.f32.mrb[0].mxu0
  %v824 = vadd.f32 %v659, %v823
  %v825 = vpop.f32.mrb[0].mxu0
  %v826 = vpop.f32.mrb[0].mxu0
  %v827 = vadd.f32 %v659, %v826
  %v828 = vpop.f32.mrb[0].mxu0
  %829 = vmatprep.mubr.bf16.mxu0 0
  %830 = vmatmul.mubr.bf16.gmra.mrb[0].mxu0 %v650
  %v831 = vpop.f32.mrb[0].mxu0
  %v832 = vadd.f32 %v659, %v831
  %v833 = vpop.f32.mrb[0].mxu0
  %v834 = vpop.f32.mrb[0].mxu0
  %v835 = vadd.f32 %v659, %v834
  %v836 = vpop.f32.mrb[0].mxu0
  %837 = vmatprep.mubr.bf16.mxu0 0
  %838 = vmatmul.mubr.bf16.gmra.mrb[0].mxu0 %v651
  %v839 = vpop.f32.mrb[0].mxu0
  %v840 = vadd.f32 %v659, %v839
  %v841 = vpop.f32.mrb[0].mxu0
  %v842 = vpop.f32.mrb[0].mxu0
  %v843 = vadd.f32 %v659, %v842
  %v844 = vpop.f32.mrb[0].mxu0
  %845 = vmatprep.mubr.bf16.mxu0 0
  %846 = vmatmul.mubr.bf16.gmra.mrb[0].mxu0 %v652
  %v847 = vpop.f32.mrb[0].mxu0
  %v848 = vadd.f32 %v659, %v847
  %v849 = vpop.f32.mrb[0].mxu0
  %v850 = vpop.f32.mrb[0].mxu0
  %v851 = vadd.f32 %v659, %v850
  %v852 = vpop.f32.mrb[0].mxu0
  %853 = vmatprep.mubr.bf16.mxu0 0
  %854 = vmatmul.mubr.bf16.gmra.mrb[0].mxu0 %v653
  %v855 = vpop.f32.mrb[0].mxu0
  %v856 = vadd.f32 %v659, %v855
  %v857 = vpop.f32.mrb[0].mxu0
  %v858 = vpop.f32.mrb[0].mxu0
  %v859 = vadd.f32 %v659, %v858
  %v860 = vpop.f32.mrb[0].mxu0
  %861 = vmatprep.mubr.bf16.mxu0 0
  %862 = vmatmul.mubr.bf16.gmra.mrb[0].mxu0 %v654
  %v863 = vpop.f32.mrb[0].mxu0
  %v864 = vadd.f32 %v659, %v863
  %v865 = vpop.f32.mrb[0].mxu0
  %v866 = vpop.f32.mrb[0].mxu0
  %v867 = vadd.f32 %v659, %v866
  %v868 = vpop.f32.mrb[0].mxu0
  %869 = vdwg.mxu0
  %v870 = vmax.f32 %v744, 0.0
  %v871 = vmax.f32 %v747, 0.0
  %v872 = vmax.f32 %v752, 0.0
  %v873 = vmax.f32 %v755, 0.0
  %v874 = vmax.f32 %v760, 0.0
  %v875 = vmax.f32 %v763, 0.0
  %v876 = vmax.f32 %v768, 0.0
  %v877 = vmax.f32 %v771, 0.0
  %v878 = vmax.f32 %v776, 0.0
  %v879 = vmax.f32 %v779, 0.0
  %v880 = vmax.f32 %v784, 0.0
  %v881 = vmax.f32 %v787, 0.0
  %v882 = vmax.f32 %v792, 0.0
  %v883 = vmax.f32 %v795, 0.0
  %v884 = vmax.f32 %v800, 0.0
  %v885 = vmax.f32 %v803, 0.0
  %v886 = vmax.f32 %v808, 0.0
  %v887 = vmax.f32 %v811, 0.0
  %v888 = vmax.f32 %v816, 0.0
  %v889 = vmax.f32 %v819, 0.0
  %v890 = vmax.f32 %v824, 0.0
  %v891 = vmax.f32 %v827, 0.0
  %v892 = vmax.f32 %v832, 0.0
  %v893 = vmax.f32 %v835, 0.0
  %v894 = vmax.f32 %v840, 0.0
  %v895 = vmax.f32 %v843, 0.0
  %v896 = vmax.f32 %v848, 0.0
  %v897 = vmax.f32 %v851, 0.0
  %v898 = vmax.f32 %v856, 0.0
  %v899 = vmax.f32 %v859, 0.0
  %v900 = vmax.f32 %v864, 0.0
  %v901 = vmax.f32 %v867, 0.0
  %v902 = vld [vmem:[%s5] sm:$0xf]
  %v903 = vld [vmem:[%s5 + $0x4] sm:$0xf]
  %v904 = vld [vmem:[%s5 + $0x8] sm:$0xf]
  %v905 = vld [vmem:[%s5 + $0xc] sm:$0xf]
  %v906 = vld [vmem:[%s5 + $0x10] sm:$0xf]
  %v907 = vld [vmem:[%s5 + $0x14] sm:$0xf]
  %v908 = vld [vmem:[%s5 + $0x18] sm:$0xf]
  %v909 = vld [vmem:[%s5 + $0x1c] sm:$0xf]
  %v910 = vld [vmem:[%s5 + $0x20] sm:$0xf]
  %v911 = vld [vmem:[%s5 + $0x24] sm:$0xf]
  %v912 = vld [vmem:[%s5 + $0x28] sm:$0xf]
  %v913 = vld [vmem:[%s5 + $0x2c] sm:$0xf]
  %v914 = vld [vmem:[%s5 + $0x30] sm:$0xf]
  %v915 = vld [vmem:[%s5 + $0x34] sm:$0xf]
  %v916 = vld [vmem:[%s5 + $0x38] sm:$0xf]
  %v917 = vld [vmem:[%s5 + $0x3c] sm:$0xf]
  %v918 = vld [vmem:[%s6] sm:$0x1]
  %v919 = vpack.c.bf16 %v871, %v870
  %v920 = vpack.c.bf16 %v873, %v872
  %v921 = vpack.c.bf16 %v875, %v874
  %v922 = vpack.c.bf16 %v877, %v876
  %v923 = vpack.c.bf16 %v879, %v878
  %v924 = vpack.c.bf16 %v881, %v880
  %v925 = vpack.c.bf16 %v883, %v882
  %v926 = vpack.c.bf16 %v885, %v884
  %v927 = vpack.c.bf16 %v887, %v886
  %v928 = vpack.c.bf16 %v889, %v888
  %v929 = vpack.c.bf16 %v891, %v890
  %v930 = vpack.c.bf16 %v893, %v892
  %v931 = vpack.c.bf16 %v895, %v894
  %v932 = vpack.c.bf16 %v897, %v896
  %v933 = vpack.c.bf16 %v899, %v898
  %v934 = vpack.c.bf16 %v901, %v900
  %v936 = vlaneseq
  %v937 = vshrl.u32 %v936, 7
  %v938 = vsub.s32 0, %v937
  %v939 = vrot.slane %v918, %v938
  %v957 = vunpack.c.l.b16 %v902
  %v958 = vunpack.c.l.b16 %v903
  %v959 = vunpack.c.l.b16 %v904
  %v960 = vunpack.c.l.b16 %v905
  %v961 = vunpack.c.l.b16 %v906
  %v962 = vunpack.c.l.b16 %v907
  %v963 = vunpack.c.l.b16 %v908
  %v964 = vunpack.c.l.b16 %v909
  %v965 = vunpack.c.l.b16 %v910
  %v966 = vunpack.c.l.b16 %v911
  %v967 = vunpack.c.l.b16 %v912
  %v968 = vunpack.c.l.b16 %v913
  %v969 = vunpack.c.l.b16 %v914
  %v970 = vunpack.c.l.b16 %v915
  %v971 = vunpack.c.l.b16 %v916
  %v972 = vunpack.c.l.b16 %v917
  %v973 = vpack.c.b16 %v958, %v957
  %v974 = vpack.c.b16 %v960, %v959
  %v975 = vpack.c.b16 %v962, %v961
  %v976 = vpack.c.b16 %v964, %v963
  %v977 = vpack.c.b16 %v966, %v965
  %v978 = vpack.c.b16 %v968, %v967
  %v979 = vpack.c.b16 %v970, %v969
  %v980 = vpack.c.b16 %v972, %v971
  %989 = vmatprep.subr.bf16.mxu0 0
  %990 = vmatpush1.bf16.msra.mxu0 %v973
  %991 = vmatprep.subr.bf16.mxu0 0
  %992 = vmatpush1.bf16.msra.mxu0 %v974
  %993 = vmatprep.subr.bf16.mxu0 0
  %994 = vmatpush1.bf16.msra.mxu0 %v975
  %995 = vmatprep.subr.bf16.mxu0 0
  %996 = vmatpush1.bf16.msra.mxu0 %v976
  %997 = vmatprep.subr.bf16.mxu0 0
  %998 = vmatpush1.bf16.msra.mxu0 %v977
  %999 = vmatprep.subr.bf16.mxu0 0
  %1000 = vmatpush1.bf16.msra.mxu0 %v978
  %1001 = vmatprep.subr.bf16.mxu0 0
  %1002 = vmatpush1.bf16.msra.mxu0 %v979
  %1003 = vmatprep.subr.bf16.mxu0 0
  %1004 = vmatpush1.bf16.msra.mxu0 %v980
  %1005 = vmatprep.subr.bf16.mxu0 0
  %1006 = vmatpush1.bf16.msra.mxu0 0
  %1007 = vmatprep.subr.bf16.mxu0 0
  %1008 = vmatpush1.bf16.msra.mxu0 0
  %1009 = vmatprep.subr.bf16.mxu0 0
  %1010 = vmatpush1.bf16.msra.mxu0 0
  %1011 = vmatprep.subr.bf16.mxu0 0
  %1012 = vmatpush1.bf16.msra.mxu0 0
  %1013 = vmatprep.subr.bf16.mxu0 0
  %1014 = vmatpush1.bf16.msra.mxu0 0
  %1015 = vmatprep.subr.bf16.mxu0 0
  %1016 = vmatpush1.bf16.msra.mxu0 0
  %1017 = vmatprep.subr.bf16.mxu0 0
  %1018 = vmatpush1.bf16.msra.mxu0 0
  %1019 = vmatprep.subr.bf16.mxu0 0
  %1020 = vmatpush1.bf16.msra.mxu0 0
  %1021 = vmatprep.mubr.bf16.mxu0 0
  %1022 = vmatmul.mubr.bf16.gmra.mrb[0].mxu0 %v919
  %v1023 = vpop.f32.mrb[0].mxu0
  %v1024 = vadd.f32 %v939, %v1023
  %v1025 = vpop.f32.mrb[0].mxu0
  %v1026 = vpop.f32.mrb[0].mxu0
  %v1027 = vadd.f32 %v939, %v1026
  %v1028 = vpop.f32.mrb[0].mxu0
  %1029 = vmatprep.mubr.bf16.mxu0 0
  %1030 = vmatmul.mubr.bf16.gmra.mrb[0].mxu0 %v920
  %v1031 = vpop.f32.mrb[0].mxu0
  %v1032 = vadd.f32 %v939, %v1031
  %v1033 = vpop.f32.mrb[0].mxu0
  %v1034 = vpop.f32.mrb[0].mxu0
  %v1035 = vadd.f32 %v939, %v1034
  %v1036 = vpop.f32.mrb[0].mxu0
  %1037 = vmatprep.mubr.bf16.mxu0 0
  %1038 = vmatmul.mubr.bf16.gmra.mrb[0].mxu0 %v921
  %v1039 = vpop.f32.mrb[0].mxu0
  %v1040 = vadd.f32 %v939, %v1039
  %v1041 = vpop.f32.mrb[0].mxu0
  %v1042 = vpop.f32.mrb[0].mxu0
  %v1043 = vadd.f32 %v939, %v1042
  %v1044 = vpop.f32.mrb[0].mxu0
  %1045 = vmatprep.mubr.bf16.mxu0 0
  %1046 = vmatmul.mubr.bf16.gmra.mrb[0].mxu0 %v922
  %v1047 = vpop.f32.mrb[0].mxu0
  %v1048 = vadd.f32 %v939, %v1047
  %v1049 = vpop.f32.mrb[0].mxu0
  %v1050 = vpop.f32.mrb[0].mxu0
  %v1051 = vadd.f32 %v939, %v1050
  %v1052 = vpop.f32.mrb[0].mxu0
  %1053 = vmatprep.mubr.bf16.mxu0 0
  %1054 = vmatmul.mubr.bf16.gmra.mrb[0].mxu0 %v923
  %v1055 = vpop.f32.mrb[0].mxu0
  %v1056 = vadd.f32 %v939, %v1055
  %v1057 = vpop.f32.mrb[0].mxu0
  %v1058 = vpop.f32.mrb[0].mxu0
  %v1059 = vadd.f32 %v939, %v1058
  %v1060 = vpop.f32.mrb[0].mxu0
  %1061 = vmatprep.mubr.bf16.mxu0 0
  %1062 = vmatmul.mubr.bf16.gmra.mrb[0].mxu0 %v924
  %v1063 = vpop.f32.mrb[0].mxu0
  %v1064 = vadd.f32 %v939, %v1063
  %v1065 = vpop.f32.mrb[0].mxu0
  %v1066 = vpop.f32.mrb[0].mxu0
  %v1067 = vadd.f32 %v939, %v1066
  %v1068 = vpop.f32.mrb[0].mxu0
  %1069 = vmatprep.mubr.bf16.mxu0 0
  %1070 = vmatmul.mubr.bf16.gmra.mrb[0].mxu0 %v925
  %v1071 = vpop.f32.mrb[0].mxu0
  %v1072 = vadd.f32 %v939, %v1071
  %v1073 = vpop.f32.mrb[0].mxu0
  %v1074 = vpop.f32.mrb[0].mxu0
  %v1075 = vadd.f32 %v939, %v1074
  %v1076 = vpop.f32.mrb[0].mxu0
  %1077 = vmatprep.mubr.bf16.mxu0 0
  %1078 = vmatmul.mubr.bf16.gmra.mrb[0].mxu0 %v926
  %v1079 = vpop.f32.mrb[0].mxu0
  %v1080 = vadd.f32 %v939, %v1079
  %v1081 = vpop.f32.mrb[0].mxu0
  %v1082 = vpop.f32.mrb[0].mxu0
  %v1083 = vadd.f32 %v939, %v1082
  %v1084 = vpop.f32.mrb[0].mxu0
  %1085 = vmatprep.mubr.bf16.mxu0 0
  %1086 = vmatmul.mubr.bf16.gmra.mrb[0].mxu0 %v927
  %v1087 = vpop.f32.mrb[0].mxu0
  %v1088 = vadd.f32 %v939, %v1087
  %v1089 = vpop.f32.mrb[0].mxu0
  %v1090 = vpop.f32.mrb[0].mxu0
  %v1091 = vadd.f32 %v939, %v1090
  %v1092 = vpop.f32.mrb[0].mxu0
  %1093 = vmatprep.mubr.bf16.mxu0 0
  %1094 = vmatmul.mubr.bf16.gmra.mrb[0].mxu0 %v928
  %v1095 = vpop.f32.mrb[0].mxu0
  %v1096 = vadd.f32 %v939, %v1095
  %v1097 = vpop.f32.mrb[0].mxu0
  %v1098 = vpop.f32.mrb[0].mxu0
  %v1099 = vadd.f32 %v939, %v1098
  %v1100 = vpop.f32.mrb[0].mxu0
  %1101 = vmatprep.mubr.bf16.mxu0 0
  %1102 = vmatmul.mubr.bf16.gmra.mrb[0].mxu0 %v929
  %v1103 = vpop.f32.mrb[0].mxu0
  %v1104 = vadd.f32 %v939, %v1103
  %v1105 = vpop.f32.mrb[0].mxu0
  %v1106 = vpop.f32.mrb[0].mxu0
  %v1107 = vadd.f32 %v939, %v1106
  %v1108 = vpop.f32.mrb[0].mxu0
  %1109 = vmatprep.mubr.bf16.mxu0 0
  %1110 = vmatmul.mubr.bf16.gmra.mrb[0].mxu0 %v930
  %v1111 = vpop.f32.mrb[0].mxu0
  %v1112 = vadd.f32 %v939, %v1111
  %v1113 = vpop.f32.mrb[0].mxu0
  %v1114 = vpop.f32.mrb[0].mxu0
  %v1115 = vadd.f32 %v939, %v1114
  %v1116 = vpop.f32.mrb[0].mxu0
  %1117 = vmatprep.mubr.bf16.mxu0 0
  %1118 = vmatmul.mubr.bf16.gmra.mrb[0].mxu0 %v931
  %v1119 = vpop.f32.mrb[0].mxu0
  %v1120 = vadd.f32 %v939, %v1119
  %v1121 = vpop.f32.mrb[0].mxu0
  %v1122 = vpop.f32.mrb[0].mxu0
  %v1123 = vadd.f32 %v939, %v1122
  %v1124 = vpop.f32.mrb[0].mxu0
  %1125 = vmatprep.mubr.bf16.mxu0 0
  %1126 = vmatmul.mubr.bf16.gmra.mrb[0].mxu0 %v932
  %v1127 = vpop.f32.mrb[0].mxu0
  %v1128 = vadd.f32 %v939, %v1127
  %v1129 = vpop.f32.mrb[0].mxu0
  %v1130 = vpop.f32.mrb[0].mxu0
  %v1131 = vadd.f32 %v939, %v1130
  %v1132 = vpop.f32.mrb[0].mxu0
  %1133 = vmatprep.mubr.bf16.mxu0 0
  %1134 = vmatmul.mubr.bf16.gmra.mrb[0].mxu0 %v933
  %v1135 = vpop.f32.mrb[0].mxu0
  %v1136 = vadd.f32 %v939, %v1135
  %v1137 = vpop.f32.mrb[0].mxu0
  %v1138 = vpop.f32.mrb[0].mxu0
  %v1139 = vadd.f32 %v939, %v1138
  %v1140 = vpop.f32.mrb[0].mxu0
  %1141 = vmatprep.mubr.bf16.mxu0 0
  %1142 = vmatmul.mubr.bf16.gmra.mrb[0].mxu0 %v934
  %v1143 = vpop.f32.mrb[0].mxu0
  %v1144 = vadd.f32 %v939, %v1143
  %v1145 = vpop.f32.mrb[0].mxu0
  %v1146 = vpop.f32.mrb[0].mxu0
  %v1147 = vadd.f32 %v939, %v1146
  %v1148 = vpop.f32.mrb[0].mxu0
  %1149 = vdwg.mxu0
  %vm1150 = vcmask 130048
  %1151 = vst.msk [vmem:[%s7] sm:$0xff] %vm1150, %v1024
  %1152 = vst.msk [vmem:[%s7 + $0x8] sm:$0xff] %vm1150, %v1027
  %1153 = vst.msk [vmem:[%s7 + $0x10] sm:$0xff] %vm1150, %v1032
  %1154 = vst.msk [vmem:[%s7 + $0x18] sm:$0xff] %vm1150, %v1035
  %1155 = vst.msk [vmem:[%s7 + $0x20] sm:$0xff] %vm1150, %v1040
  %1156 = vst.msk [vmem:[%s7 + $0x28] sm:$0xff] %vm1150, %v1043
  %1157 = vst.msk [vmem:[%s7 + $0x30] sm:$0xff] %vm1150, %v1048
  %1158 = vst.msk [vmem:[%s7 + $0x38] sm:$0xff] %vm1150, %v1051
  %1159 = vst.msk [vmem:[%s7 + $0x40] sm:$0xff] %vm1150, %v1056
  %1160 = vst.msk [vmem:[%s7 + $0x48] sm:$0xff] %vm1150, %v1059
  %1161 = vst.msk [vmem:[%s7 + $0x50] sm:$0xff] %vm1150, %v1064
  %1162 = vst.msk [vmem:[%s7 + $0x58] sm:$0xff] %vm1150, %v1067
  %1163 = vst.msk [vmem:[%s7 + $0x60] sm:$0xff] %vm1150, %v1072
  %1164 = vst.msk [vmem:[%s7 + $0x68] sm:$0xff] %vm1150, %v1075
  %1165 = vst.msk [vmem:[%s7 + $0x70] sm:$0xff] %vm1150, %v1080
  %1166 = vst.msk [vmem:[%s7 + $0x78] sm:$0xff] %vm1150, %v1083
  %1167 = vst.msk [vmem:[%s7 + $0x80] sm:$0xff] %vm1150, %v1088
  %1168 = vst.msk [vmem:[%s7 + $0x88] sm:$0xff] %vm1150, %v1091
  %1169 = vst.msk [vmem:[%s7 + $0x90] sm:$0xff] %vm1150, %v1096
  %1170 = vst.msk [vmem:[%s7 + $0x98] sm:$0xff] %vm1150, %v1099
  %1171 = vst.msk [vmem:[%s7 + $0xa0] sm:$0xff] %vm1150, %v1104
  %1172 = vst.msk [vmem:[%s7 + $0xa8] sm:$0xff] %vm1150, %v1107
  %1173 = vst.msk [vmem:[%s7 + $0xb0] sm:$0xff] %vm1150, %v1112
  %1174 = vst.msk [vmem:[%s7 + $0xb8] sm:$0xff] %vm1150, %v1115
  %1175 = vst.msk [vmem:[%s7 + $0xc0] sm:$0xff] %vm1150, %v1120
  %1176 = vst.msk [vmem:[%s7 + $0xc8] sm:$0xff] %vm1150, %v1123
  %1177 = vst.msk [vmem:[%s7 + $0xd0] sm:$0xff] %vm1150, %v1128
  %1178 = vst.msk [vmem:[%s7 + $0xd8] sm:$0xff] %vm1150, %v1131
  %1179 = vst.msk [vmem:[%s7 + $0xe0] sm:$0xff] %vm1150, %v1136
  %1180 = vst.msk [vmem:[%s7 + $0xe8] sm:$0xff] %vm1150, %v1139
  %1181 = vst.msk [vmem:[%s7 + $0xf0] sm:$0xff] %vm1150, %v1144
  %1182 = vst.msk [vmem:[%s7 + $0xf8] sm:$0xff] %vm1150, %v1147
  // Predicated region
  $region30: #{tpu_custom_call.1} parent=0 // pred_check
    _
  $region31: #{tpu_custom_call.1} parent=0 // pred_check_branch
    %1184 = sbr.rel (0) target = $region33
  $region32: #{tpu_custom_call.1} parent=0 // pred_region
    _
  $region33: #{tpu_custom_call.1} parent=0 // pred_fallthru
    _
  // Predicated region
  $region34: #{tpu_custom_call.1} parent=0 // pred_check
    _
  $region35: #{tpu_custom_call.1} parent=0 // pred_check_branch
    %1186 = sbr.rel (0) target = $region37
  $region36: #{tpu_custom_call.1} parent=0 // pred_region
    _
  $region37: #{tpu_custom_call.1} parent=0 // pred_fallthru
    _

</llo_original>
